<compile_context>
chip_gen: v5e
topology: v5e:2x2
jax: 0.10.0
libtpu: 0.0.40
codegen_flags: <defaults>
</compile_context>

<pallas_src>
import jax
import jax.numpy as jnp
from jax.experimental import pallas as pl
from jax.experimental.pallas import tpu as pltpu


# -----------------------------------------------------------------------------
# Kernel
# -----------------------------------------------------------------------------
def _fusion_kernel(x_ref, y_ref, w1_ref, b1_ref, w2_ref, b2_ref, o_ref):
    # Blocks: x/y/o are (1, C, T); w1 (C, 2C); w2 (C, C); biases (C, 1).
    x = x_ref[0]                                    # (C, T)
    y = y_ref[0]

    # Conv2d(2C -> C, 1x1) on cat([x, y], dim=1): one MXU dot against the
    # unsplit (C, 2C) weight, contracting over the (2C, T) sublane stack.
    xy = jnp.concatenate([x, y], axis=0)            # (2C, T)
    h = jnp.dot(w1_ref[...], xy, preferred_element_type=jnp.float32) + b1_ref[...]
    h = jnp.maximum(h, 0.0)                         # ReLU

    # BatchNorm (running stats, folded into w2/b2) -> Conv2d(C -> C, 1x1) -> Sigmoid.
    logit = jnp.dot(w2_ref[...], h, preferred_element_type=jnp.float32) + b2_ref[...]
    gate = jax.nn.sigmoid(logit)                    # f32 gate in (0, 1)

    # Blend: x*g + y*(1-g) == y + g*(x - y).
    if o_ref.dtype == jnp.bfloat16:
        # bf16 elementwise path (v6e/v7x bf16 VALU): halves vreg traffic.
        o_ref[0] = y + gate.astype(jnp.bfloat16) * (x - y)
    else:
        xf = x.astype(jnp.float32)
        yf = y.astype(jnp.float32)
        o_ref[0] = (yf + gate * (xf - yf)).astype(o_ref.dtype)


# -----------------------------------------------------------------------------
# Tiling helpers
# -----------------------------------------------------------------------------
def _round_up(x, m):
    return ((x + m - 1) // m) * m


def _vmem_capacity_bytes():
    """Physical VMEM per TensorCore (generation-aware, with a safe fallback)."""
    try:
        return int(pltpu.get_tpu_info().vmem_capacity_bytes)
    except Exception:
        return 64 << 20   # conservative: v7x has 64 MiB/TC (v5e/v6e: 128 MiB)


def _pick_tile_hw(hw, n, c, itemsize, budget_bytes):
    """Spatial tile (lanes) for the (C, tile) blocks.

    Bounded by (a) the VMEM budget including f32 intermediates, (b) ~2 MiB per
    streamed block (already at the HBM roofline), and (c) >= ~8 total grid
    steps so the DMA pipeline overlaps and both v7x TensorCores get work.
    Always a multiple of 128; H*W is padded up to a tile multiple by the caller.
    """
    # VMEM bytes per spatial lane of one grid step:
    #   3 streams (x, y, out) x 2 pipeline buffers x C x itemsize
    #   + ~8C rows of f32 intermediates (xy stack, h, gate, blend temps).
    per_lane = c * (3 * 2 * itemsize + 8 * 4)
    max_tile_vmem = max(128, budget_bytes // per_lane)
    max_tile_stream = max(128, (2 << 20) // (c * itemsize))
    hw128 = _round_up(hw, 128)
    max_tile_steps = max(128, (n * hw128) // 8)

    tile = min(max_tile_vmem, max_tile_stream, max_tile_steps, hw128)
    tile = max(128, (tile // 128) * 128)
    # Re-balance over the resulting block count so ragged spatial extents pad
    # by < 128 lanes per block instead of up to a full tile.
    nblk = -(-hw // tile)
    return _round_up(-(-hw // nblk), 128)


# -----------------------------------------------------------------------------
# Wrapper
# -----------------------------------------------------------------------------
def feature_fusion(x_nchw, y_nchw, params):
    """FeatureFusion forward. x, y: (N, C, H, W) -> (N, C, H, W). No transposes."""
    assert x_nchw.shape == y_nchw.shape and x_nchw.dtype == y_nchw.dtype
    N, C, H, W = x_nchw.shape
    HW = H * W
    w1, b1, w2, b2 = params
    itemsize = jnp.dtype(x_nchw.dtype).itemsize

    # Free contiguous reshapes (NCHW row-major -> (N, C, H*W)).
    x3 = x_nchw.reshape(N, C, HW)
    y3 = y_nchw.reshape(N, C, HW)

    # Generation-aware VMEM budget, net of the resident (double-buffered) weights.
    vmem_cap = _vmem_capacity_bytes()
    w_itemsize = jnp.dtype(w1.dtype).itemsize
    weight_vmem = 2 * (3 * C * C + 2 * C) * w_itemsize
    budget = max(4 << 20, int(0.55 * vmem_cap) - weight_vmem)
    tile_hw = _pick_tile_hw(HW, N, C, itemsize, budget)

    # Pad ragged H*W up to a tile multiple; sliced off after the call.
    HW_pad = _round_up(HW, tile_hw)
    if HW_pad != HW:
        padding = ((0, 0), (0, 0), (0, HW_pad - HW))
        x3 = jnp.pad(x3, padding)
        y3 = jnp.pad(y3, padding)

    grid = (N, HW_pad // tile_hw)

    xy_spec = pl.BlockSpec((1, C, tile_hw), lambda n, s: (n, 0, s))
    w1_spec = pl.BlockSpec((C, 2 * C), lambda n, s: (0, 0))
    w2_spec = pl.BlockSpec((C, C), lambda n, s: (0, 0))
    b_spec = pl.BlockSpec((C, 1), lambda n, s: (0, 0))
    # NOTE: the weight/bias blocks are constant across the grid; single-buffering
    # them (pipeline_mode=pl.Buffered(1)) would free ~3*C*C*4 more VMEM bytes at
    # large C; left at the default here and accounted for in weight_vmem instead.

    # VMEM limit: streamed blocks (2x buffered) + f32 intermediates + weights
    # + Mosaic scratch headroom, capped well below physical VMEM.
    stream_bytes = 3 * 2 * C * tile_hw * itemsize
    interm_bytes = 8 * C * tile_hw * 4
    vmem_limit = int(min(
        max(stream_bytes + interm_bytes + weight_vmem + (4 << 20), 16 << 20),
        int(0.8 * vmem_cap)))

    # Advisory cost model: memory-bound streaming op.
    cost = pl.CostEstimate(
        flops=int(N * HW * (6 * C * C + 6 * C)),
        transcendentals=int(N * HW * C),
        bytes_accessed=int(3 * N * C * HW * itemsize + weight_vmem // 2),
    )

    out = pl.pallas_call(
        _fusion_kernel,
        out_shape=jax.ShapeDtypeStruct((N, C, HW_pad), x_nchw.dtype),
        grid=grid,
        in_specs=[xy_spec, xy_spec, w1_spec, b_spec, w2_spec, b_spec],
        out_specs=xy_spec,
        compiler_params=pltpu.CompilerParams(
            dimension_semantics=("parallel", "parallel"),
            vmem_limit_bytes=vmem_limit,
        ),
        cost_estimate=cost,
    )(x3, y3, w1, b1, w2, b2)

    if HW_pad != HW:
        out = out[:, :, :HW]
    return out.reshape(N, C, H, W)


# -----------------------------------------------------------------------------
# Parameters (PyTorch-style raw params + BN fold) and pure-JAX reference
# -----------------------------------------------------------------------------
def init_raw_params(key, in_channels, dtype=jnp.float32):
    """Random parameters mirroring the PyTorch module (eval-mode BatchNorm,
    non-identity running stats so the fold is actually exercised)."""
    C = in_channels
    k = jax.random.split(key, 8)
    return dict(
        w1=jax.random.normal(k[0], (C, 2 * C), dtype) * 0.1,    # Conv2d(2C, C, 1)
        b1=jax.random.normal(k[1], (C,), dtype) * 0.1,
        gamma=1.0 + 0.2 * jax.random.normal(k[2], (C,), dtype),  # BatchNorm2d(C)
        beta=0.1 * jax.random.normal(k[3], (C,), dtype),
        mean=0.2 * jax.random.normal(k[4], (C,), dtype),
        var=0.5 + jax.random.uniform(k[5], (C,), dtype),
        eps=1e-5,
        w2=jax.random.normal(k[6], (C, C), dtype) * 0.1,         # Conv2d(C, C, 1)
        b2=jax.random.normal(k[7], (C,), dtype) * 0.1,
    )


def fold_params(raw):
    """Fold eval-mode BatchNorm (which sits between ReLU and conv2) into conv2:
    W2 @ (scale*h + shift) + b2 == (W2*scale) @ h + (W2 @ shift + b2)."""
    C = raw["w1"].shape[0]
    scale = raw["gamma"] / jnp.sqrt(raw["var"] + raw["eps"])
    shift = raw["beta"] - raw["mean"] * scale
    w2f = raw["w2"] * scale[None, :]
    b2f = raw["w2"] @ shift + raw["b2"]
    return (raw["w1"], raw["b1"].reshape(C, 1), w2f, b2f.reshape(C, 1))
    # TODO(synk): training-mode BatchNorm (batch statistics) is not reproduced;
    # only the inference/running-stats form is folded.


def _reference(x, y, raw):
    """Pure-JAX NCHW re-implementation of the *unfolded* PyTorch module (eval mode)."""
    hp = jax.lax.Precision.HIGHEST
    b = lambda v: v[None, :, None, None]
    cat = jnp.concatenate([x, y], axis=1)                          # (N, 2C, H, W)
    h = jnp.einsum('oi,nihw->nohw', raw["w1"], cat, precision=hp) + b(raw["b1"])
    h = jnp.maximum(h, 0.0)
    scale = raw["gamma"] / jnp.sqrt(raw["var"] + raw["eps"])
    h = (h - b(raw["mean"])) * b(scale) + b(raw["beta"])
    logit = jnp.einsum('oi,nihw->nohw', raw["w2"], h, precision=hp) + b(raw["b2"])
    g = jax.nn.sigmoid(logit)
    return x * g + y * (1.0 - g)


# -----------------------------------------------------------------------------
# Self-test
# -----------------------------------------------------------------------------
if __name__ == "__main__":
    key = jax.random.PRNGKey(0)
    kx, ky, kp, kx2, ky2 = jax.random.split(key, 5)

    # --- Test 1: aligned spatial (N=2, C=4, 16x16), f32 ----------------------
    N, C, H, W = 2, 4, 16, 16
    x = jax.random.normal(kx, (N, C, H, W), jnp.float32)
    y = jax.random.normal(ky, (N, C, H, W), jnp.float32)
    raw = init_raw_params(kp, C)
    params = fold_params(raw)

    out = jax.block_until_ready(feature_fusion(x, y, params))
    ref = _reference(x, y, raw)
    assert out.shape == (N, C, H, W)
    assert jnp.allclose(out, ref, atol=1e-3, rtol=1e-3), \
        float(jnp.abs(out - ref).max())

    # --- Test 2: ragged spatial (15x13) exercising the padding path ----------
    N2, H2, W2 = 1, 15, 13
    x2 = jax.random.normal(kx2, (N2, C, H2, W2), jnp.float32)
    y2 = jax.random.normal(ky2, (N2, C, H2, W2), jnp.float32)
    out2 = jax.block_until_ready(feature_fusion(x2, y2, params))
    ref2 = _reference(x2, y2, raw)
    assert out2.shape == (N2, C, H2, W2)
    assert jnp.allclose(out2, ref2, atol=1e-3, rtol=1e-3), \
        float(jnp.abs(out2 - ref2).max())

    # --- Test 3: bf16 I/O (the biggest memory-bound lever) -------------------
    xb = x.astype(jnp.bfloat16)
    yb = y.astype(jnp.bfloat16)
    outb = jax.block_until_ready(feature_fusion(xb, yb, params))
    refb = _reference(xb.astype(jnp.float32), yb.astype(jnp.float32), raw)
    assert outb.dtype == jnp.bfloat16
    assert jnp.allclose(outb.astype(jnp.float32), refb, atol=5e-2, rtol=5e-2), \
        float(jnp.abs(outb.astype(jnp.float32) - refb).max())

    print("KERNEL_OK")
</pallas_src>

<mosaic_0001>
module attributes {stable_mosaic.version = 11 : i64} {
  func.func @_fusion_kernel(%arg0: i32, %arg1: i32, %arg2: memref<1x4x128xf32, #tpu.memory_space<vmem>>, %arg3: memref<1x4x128xf32, #tpu.memory_space<vmem>>, %arg4: memref<4x8xf32, #tpu.memory_space<vmem>>, %arg5: memref<4x1xf32, #tpu.memory_space<vmem>>, %arg6: memref<4x4xf32, #tpu.memory_space<vmem>>, %arg7: memref<4x1xf32, #tpu.memory_space<vmem>>, %arg8: memref<1x4x128xf32, #tpu.memory_space<vmem>>) attributes {dimension_semantics = [#tpu.dimension_semantics<parallel>, #tpu.dimension_semantics<parallel>], iteration_bounds = array<i64: 2, 2>, scalar_prefetch = 0 : i64, scratch_operands = 0 : i64, tpu.core_type = #tpu.core_type<tc>, window_params = [{transform_indices = @transform_0, window_bounds = array<i64: 1, 4, 128>}, {transform_indices = @transform_1, window_bounds = array<i64: 1, 4, 128>}, {pipeline_mode = #tpu.pipeline_mode<synchronous>, transform_indices = @transform_2, window_bounds = array<i64: 4, 8>}, {pipeline_mode = #tpu.pipeline_mode<synchronous>, transform_indices = @transform_3, window_bounds = array<i64: 4, 1>}, {pipeline_mode = #tpu.pipeline_mode<synchronous>, transform_indices = @transform_4, window_bounds = array<i64: 4, 4>}, {pipeline_mode = #tpu.pipeline_mode<synchronous>, transform_indices = @transform_5, window_bounds = array<i64: 4, 1>}, {transform_indices = @transform_6, window_bounds = array<i64: 1, 4, 128>}]} {
    %c0 = arith.constant 0 : index
    %c0_0 = arith.constant 0 : index
    %c0_1 = arith.constant 0 : index
    %0 = vector.load %arg2[%c0, %c0_0, %c0_1] : memref<1x4x128xf32, #tpu.memory_space<vmem>>, vector<1x4x128xf32>
    %1 = vector.shape_cast %0 : vector<1x4x128xf32> to vector<4x128xf32>
    %c0_2 = arith.constant 0 : index
    %c0_3 = arith.constant 0 : index
    %c0_4 = arith.constant 0 : index
    %2 = vector.load %arg3[%c0_2, %c0_3, %c0_4] : memref<1x4x128xf32, #tpu.memory_space<vmem>>, vector<1x4x128xf32>
    %3 = vector.shape_cast %2 : vector<1x4x128xf32> to vector<4x128xf32>
    %4 = tpu.concatenate %1, %3 in 0 : vector<4x128xf32>, vector<4x128xf32> -> vector<8x128xf32>
    %c0_5 = arith.constant 0 : index
    %c0_6 = arith.constant 0 : index
    %5 = vector.load %arg4[%c0_5, %c0_6] : memref<4x8xf32, #tpu.memory_space<vmem>>, vector<4x8xf32>
    %cst = arith.constant dense<0.000000e+00> : vector<4x128xf32>
    %6 = tpu.matmul %5, %4, %cst {dimension_numbers = #tpu.dot_dimension_numbers<[1], [0], [0], [1], [0, 0, 1, 1], [], []>} : vector<4x8xf32>, vector<8x128xf32>, vector<4x128xf32> -> vector<4x128xf32>
    %c0_7 = arith.constant 0 : index
    %c0_8 = arith.constant 0 : index
    %7 = vector.load %arg5[%c0_7, %c0_8] : memref<4x1xf32, #tpu.memory_space<vmem>>, vector<4x1xf32>
    %8 = vector.broadcast %7 : vector<4x1xf32> to vector<4x128xf32>
    %9 = arith.addf %6, %8 : vector<4x128xf32>
    %cst_9 = arith.constant 0.000000e+00 : f32
    %10 = vector.broadcast %cst_9 : f32 to vector<4x128xf32>
    %11 = arith.maximumf %9, %10 : vector<4x128xf32>
    %c0_10 = arith.constant 0 : index
    %c0_11 = arith.constant 0 : index
    %12 = vector.load %arg6[%c0_10, %c0_11] : memref<4x4xf32, #tpu.memory_space<vmem>>, vector<4x4xf32>
    %cst_12 = arith.constant dense<0.000000e+00> : vector<4x128xf32>
    %13 = tpu.matmul %12, %11, %cst_12 {dimension_numbers = #tpu.dot_dimension_numbers<[1], [0], [0], [1], [0, 0, 1, 1], [], []>} : vector<4x4xf32>, vector<4x128xf32>, vector<4x128xf32> -> vector<4x128xf32>
    %c0_13 = arith.constant 0 : index
    %c0_14 = arith.constant 0 : index
    %14 = vector.load %arg7[%c0_13, %c0_14] : memref<4x1xf32, #tpu.memory_space<vmem>>, vector<4x1xf32>
    %15 = vector.broadcast %14 : vector<4x1xf32> to vector<4x128xf32>
    %16 = arith.addf %13, %15 : vector<4x128xf32>
    %17 = arith.negf %16 : vector<4x128xf32>
    %18 = math.exp %17 : vector<4x128xf32>
    %cst_15 = arith.constant 1.000000e+00 : f32
    %19 = vector.broadcast %cst_15 : f32 to vector<4x128xf32>
    %20 = arith.addf %19, %18 : vector<4x128xf32>
    %21 = arith.divf %19, %20 : vector<4x128xf32>
    %22 = arith.subf %1, %3 : vector<4x128xf32>
    %23 = arith.mulf %21, %22 : vector<4x128xf32>
    %24 = arith.addf %3, %23 : vector<4x128xf32>
    %c0_16 = arith.constant 0 : index
    %c0_17 = arith.constant 0 : index
    %c0_18 = arith.constant 0 : index
    %25 = vector.load %arg8[%c0_16, %c0_17, %c0_18] : memref<1x4x128xf32, #tpu.memory_space<vmem>>, vector<1x4x128xf32>
    %26 = vector.shape_cast %25 : vector<1x4x128xf32> to vector<4x128xf32>
    %27 = vector.shape_cast %24 : vector<4x128xf32> to vector<1x4x128xf32>
    tpu.vector_store %arg8[%c0_16, %c0_17, %c0_18], %27 {strides = array<i32>} : memref<1x4x128xf32, #tpu.memory_space<vmem>>, vector<1x4x128xf32>,
    return
  }
  func.func @transform_0(%arg0: i32, %arg1: i32) -> (i32, i32, i32) {
    %c0_i32 = arith.constant 0 : i32
    %c0_i32_0 = arith.constant 0 : i32
    return %arg0, %c0_i32, %arg1 : i32, i32, i32
  }
  func.func @transform_1(%arg0: i32, %arg1: i32) -> (i32, i32, i32) {
    %c0_i32 = arith.constant 0 : i32
    %c0_i32_0 = arith.constant 0 : i32
    return %arg0, %c0_i32, %arg1 : i32, i32, i32
  }
  func.func @transform_2(%arg0: i32, %arg1: i32) -> (i32, i32) {
    %c0_i32 = arith.constant 0 : i32
    %c0_i32_0 = arith.constant 0 : i32
    %c0_i32_1 = arith.constant 0 : i32
    return %c0_i32, %c0_i32_0 : i32, i32
  }
  func.func @transform_3(%arg0: i32, %arg1: i32) -> (i32, i32) {
    %c0_i32 = arith.constant 0 : i32
    %c0_i32_0 = arith.constant 0 : i32
    %c0_i32_1 = arith.constant 0 : i32
    return %c0_i32, %c0_i32_0 : i32, i32
  }
  func.func @transform_4(%arg0: i32, %arg1: i32) -> (i32, i32) {
    %c0_i32 = arith.constant 0 : i32
    %c0_i32_0 = arith.constant 0 : i32
    %c0_i32_1 = arith.constant 0 : i32
    return %c0_i32, %c0_i32_0 : i32, i32
  }
  func.func @transform_5(%arg0: i32, %arg1: i32) -> (i32, i32) {
    %c0_i32 = arith.constant 0 : i32
    %c0_i32_0 = arith.constant 0 : i32
    %c0_i32_1 = arith.constant 0 : i32
    return %c0_i32, %c0_i32_0 : i32, i32
  }
  func.func @transform_6(%arg0: i32, %arg1: i32) -> (i32, i32, i32) {
    %c0_i32 = arith.constant 0 : i32
    %c0_i32_0 = arith.constant 0 : i32
    return %arg0, %c0_i32, %arg1 : i32, i32, i32
  }
}

</mosaic_0001>

<llo_original>
// kernel: tpu_custom_call.1
$region0: #{tpu_custom_call.1}
  #allocation0 [shape = 'u32[]', space=smem, size = 0x4, offset = 0x4, fixed_abs, tag = 'smem constant byte address 0x4 - core index']
  #allocation1 [shape = 'u32[72,128]{1,0:T(1,128)}', space=vmem, size = 0x9000, scoped, tag = 'internal scratch']
  %s0 = inlined_call_operand.hbm [shape: f32[2,4,256], index: 0, kind: input, shape index: {}]
  %s1 = inlined_call_operand.hbm [shape: f32[2,4,256], index: 1, kind: input, shape index: {}]
  %s2 = inlined_call_operand.vmem [shape: f32[4,8], index: 2, kind: input, shape index: {}]
  %s3 = inlined_call_operand.vmem [shape: f32[4,1], index: 3, kind: input, shape index: {}]
  %s4 = inlined_call_operand.vmem [shape: f32[4,4], index: 4, kind: input, shape index: {}]
  %s5 = inlined_call_operand.vmem [shape: f32[4,1], index: 5, kind: input, shape index: {}]
  %s6 = inlined_call_operand.hbm [shape: f32[2,4,256], index: 6, kind: output, shape index: {}]
  %s7 = sld [smem:[#allocation0]]
  $region65: #{tpu_custom_call.1} parent=0
    _
  %s9 = ssub.s32 1, %s7
  %s10 = scalar_select 0, %s9, %s7
  $region1: #{tpu_custom_call.1} parent=0
    #allocation2 [shape = 'u8[4096]{0}', space=vmem, size = 0x1000, scoped, tag = 'input window, operand 0']
    #allocation3 [shape = 's32[2]{0}', space=sflag, size = 0x8, scoped, tag = 'scoped memory for tpu_custom_call.1']
    #allocation4 [shape = 's32[2]{0}', space=sflag, size = 0x8, scoped, tag = 'scoped memory for tpu_custom_call.1']
    #allocation5 [shape = 'u8[4096]{0}', space=vmem, size = 0x1000, scoped, tag = 'input window, operand 1']
    #allocation6 [shape = 's32[2]{0}', space=sflag, size = 0x8, scoped, tag = 'scoped memory for tpu_custom_call.1']
    #allocation7 [shape = 'u8[4096]{0}', space=vmem, size = 0x1000, scoped, tag = 'output window, operand 0']
    %11 = vsyncpa [#allocation3], 0
    %s12 = scalar_lea.sflag [#allocation3], 1
    %13 = vsyncpa %s12, 0
    %14 = vsyncpa [#allocation6], 0
    %s15 = scalar_lea.sflag [#allocation6], 1
    %16 = vsyncpa %s15, 0
    %17 = vsyncpa [#allocation4], 0
    %s18 = scalar_lea.sflag [#allocation4], 1
    %19 = vsyncpa %s18, 0
    loop: start=0, step=1, limit=6
    $region2: #{tpu_custom_call.1} parent=1 // loop_pre_header
      _
    $region3: #{tpu_custom_call.1} parent=1 // loop_header
      %s21 = sphi 0, %s25
      %p22 = scmp.ge.s32.totalorder %s21, 6
      %s28 = sphi 0, %s40
      %s29 = sphi 0, %s36
      %s30 = sphi 0, %s28
      %s31 = sphi 0, %s29
      %s32 = sphi 0, %s30
      %s33 = sphi 0, %s31
      %s45 = sphi 0, %s47
      %s48 = sphi 0, %s45
      %s49 = sphi 0, %s48
      %s65 = sphi 0, %s49
      %s73 = sphi 0, %s75
      %s76 = sphi 0, %s73
      %s77 = sphi 0, %s76
      %s93 = sphi 0, %s77
      %s97 = sphi 0, %s97
      %s99 = sphi 0, %s97
      %s100 = sphi 0, %s99
      %s114 = sphi 0, %s100
      %s118 = sphi 0, %s118
      %s120 = sphi 0, %s118
      %s121 = sphi 0, %s120
      %s135 = sphi 0, %s121
      %s139 = sphi 0, %s139
      %s141 = sphi 0, %s139
      %s142 = sphi 0, %s141
      %s156 = sphi 0, %s142
      %s160 = sphi 0, %s160
      %s162 = sphi 0, %s160
      %s163 = sphi 0, %s162
      %s177 = sphi 0, %s163
      %s185 = sphi 0, %s187
      %s188 = sphi 0, %s185
      %s189 = sphi 0, %s188
      %s205 = sphi 0, %s189
    $region4: #{tpu_custom_call.1} parent=1 // loop_header_branch
      %24 = sbr.rel (%p22) target = $region8
    $region5: #{tpu_custom_call.1} parent=1 // loop_body
      %s26 = ssub.s32 %s21, 1
      %s27 = ssub.s32 %s21, 2
      %s34 = sadd.s32 1, %s29
      %p35 = scmp.ge.s32.totalorder %s34, 2
      %s36 = scalar_select %p35, 0, %s34
      %s37 = sadd.s32 1, %s28
      %s38 = scalar_select %p35, %s37, %s28
      %p39 = scmp.ge.s32.totalorder %s38, 2
      %s40 = scalar_select %p39, 0, %s38
      %s41 = ssub.s32 %s28, %s40
      %s42 = ssub.s32 %s29, %s36
      %s43 = sor.u32 %s41, %s42
      %p44 = scmp.eq.s32.totalorder %s43, 0
      %s46 = sadd.s32 %s45, 1
      %s47 = scalar_select %p44, %s45, %s46
      %p50 = pneg %p44
      %p51 = scmp.eq.s32.totalorder %s21, 3
      %p52 = por %p50, %p51
      %p53 = scmp.ne.s32.totalorder %s45, %s48
      %p54 = scmp.eq.s32.totalorder %s21, 0
      %p55 = por %p53, %p54
      %p56 = scmp.ne.s32.totalorder %s45, %s48
      %p57 = scmp.eq.s32.totalorder %s26, 3
      %p58 = por %p56, %p57
      %p59 = scmp.ne.s32.totalorder %s48, %s49
      %p60 = scmp.eq.s32.totalorder %s26, 0
      %p61 = por %p59, %p60
      %p62 = scmp.ne.s32.totalorder %s48, %s49
      %p63 = scmp.eq.s32.totalorder %s27, 3
      %p64 = por %p62, %p63
      %p66 = scmp.ne.s32.totalorder %s49, %s65
      %p67 = scmp.eq.s32.totalorder %s27, 0
      %p68 = por %p66, %p67
      %s69 = ssub.s32 %s28, %s40
      %s70 = ssub.s32 %s29, %s36
      %s71 = sor.u32 %s69, %s70
      %p72 = scmp.eq.s32.totalorder %s71, 0
      %s74 = sadd.s32 %s73, 1
      %s75 = scalar_select %p72, %s73, %s74
      %p78 = pneg %p72
      %p79 = scmp.eq.s32.totalorder %s21, 3
      %p80 = por %p78, %p79
      %p81 = scmp.ne.s32.totalorder %s73, %s76
      %p82 = scmp.eq.s32.totalorder %s21, 0
      %p83 = por %p81, %p82
      %p84 = scmp.ne.s32.totalorder %s73, %s76
      %p85 = scmp.eq.s32.totalorder %s26, 3
      %p86 = por %p84, %p85
      %p87 = scmp.ne.s32.totalorder %s76, %s77
      %p88 = scmp.eq.s32.totalorder %s26, 0
      %p89 = por %p87, %p88
      %p90 = scmp.ne.s32.totalorder %s76, %s77
      %p91 = scmp.eq.s32.totalorder %s27, 3
      %p92 = por %p90, %p91
      %p94 = scmp.ne.s32.totalorder %s77, %s93
      %p95 = scmp.eq.s32.totalorder %s27, 0
      %p96 = por %p94, %p95
      %s98 = sadd.s32 %s97, 1
      %p101 = scmp.eq.s32.totalorder %s21, 3
      %p102 = scmp.ne.s32.totalorder %s97, %s99
      %p103 = scmp.eq.s32.totalorder %s21, 0
      %p104 = por %p102, %p103
      %p105 = scmp.ne.s32.totalorder %s97, %s99
      %p106 = scmp.eq.s32.totalorder %s26, 3
      %p107 = por %p105, %p106
      %p108 = scmp.ne.s32.totalorder %s99, %s100
      %p109 = scmp.eq.s32.totalorder %s26, 0
      %p110 = por %p108, %p109
      %p111 = scmp.ne.s32.totalorder %s99, %s100
      %p112 = scmp.eq.s32.totalorder %s27, 3
      %p113 = por %p111, %p112
      %p115 = scmp.ne.s32.totalorder %s100, %s114
      %p116 = scmp.eq.s32.totalorder %s27, 0
      %p117 = por %p115, %p116
      %s119 = sadd.s32 %s118, 1
      %p122 = scmp.eq.s32.totalorder %s21, 3
      %p123 = scmp.ne.s32.totalorder %s118, %s120
      %p124 = scmp.eq.s32.totalorder %s21, 0
      %p125 = por %p123, %p124
      %p126 = scmp.ne.s32.totalorder %s118, %s120
      %p127 = scmp.eq.s32.totalorder %s26, 3
      %p128 = por %p126, %p127
      %p129 = scmp.ne.s32.totalorder %s120, %s121
      %p130 = scmp.eq.s32.totalorder %s26, 0
      %p131 = por %p129, %p130
      %p132 = scmp.ne.s32.totalorder %s120, %s121
      %p133 = scmp.eq.s32.totalorder %s27, 3
      %p134 = por %p132, %p133
      %p136 = scmp.ne.s32.totalorder %s121, %s135
      %p137 = scmp.eq.s32.totalorder %s27, 0
      %p138 = por %p136, %p137
      %s140 = sadd.s32 %s139, 1
      %p143 = scmp.eq.s32.totalorder %s21, 3
      %p144 = scmp.ne.s32.totalorder %s139, %s141
      %p145 = scmp.eq.s32.totalorder %s21, 0
      %p146 = por %p144, %p145
      %p147 = scmp.ne.s32.totalorder %s139, %s141
      %p148 = scmp.eq.s32.totalorder %s26, 3
      %p149 = por %p147, %p148
      %p150 = scmp.ne.s32.totalorder %s141, %s142
      %p151 = scmp.eq.s32.totalorder %s26, 0
      %p152 = por %p150, %p151
      %p153 = scmp.ne.s32.totalorder %s141, %s142
      %p154 = scmp.eq.s32.totalorder %s27, 3
      %p155 = por %p153, %p154
      %p157 = scmp.ne.s32.totalorder %s142, %s156
      %p158 = scmp.eq.s32.totalorder %s27, 0
      %p159 = por %p157, %p158
      %s161 = sadd.s32 %s160, 1
      %p164 = scmp.eq.s32.totalorder %s21, 3
      %p165 = scmp.ne.s32.totalorder %s160, %s162
      %p166 = scmp.eq.s32.totalorder %s21, 0
      %p167 = por %p165, %p166
      %p168 = scmp.ne.s32.totalorder %s160, %s162
      %p169 = scmp.eq.s32.totalorder %s26, 3
      %p170 = por %p168, %p169
      %p171 = scmp.ne.s32.totalorder %s162, %s163
      %p172 = scmp.eq.s32.totalorder %s26, 0
      %p173 = por %p171, %p172
      %p174 = scmp.ne.s32.totalorder %s162, %s163
      %p175 = scmp.eq.s32.totalorder %s27, 3
      %p176 = por %p174, %p175
      %p178 = scmp.ne.s32.totalorder %s163, %s177
      %p179 = scmp.eq.s32.totalorder %s27, 0
      %p180 = por %p178, %p179
      %s181 = ssub.s32 %s28, %s40
      %s182 = ssub.s32 %s29, %s36
      %s183 = sor.u32 %s181, %s182
      %p184 = scmp.eq.s32.totalorder %s183, 0
      %s186 = sadd.s32 %s185, 1
      %s187 = scalar_select %p184, %s185, %s186
      %p190 = pneg %p184
      %p191 = scmp.eq.s32.totalorder %s21, 3
      %p192 = por %p190, %p191
      %p193 = scmp.ne.s32.totalorder %s185, %s188
      %p194 = scmp.eq.s32.totalorder %s21, 0
      %p195 = por %p193, %p194
      %p196 = scmp.ne.s32.totalorder %s185, %s188
      %p197 = scmp.eq.s32.totalorder %s26, 3
      %p198 = por %p196, %p197
      %p199 = scmp.ne.s32.totalorder %s188, %s189
      %p200 = scmp.eq.s32.totalorder %s26, 0
      %p201 = por %p199, %p200
      %p202 = scmp.ne.s32.totalorder %s188, %s189
      %p203 = scmp.eq.s32.totalorder %s27, 3
      %p204 = por %p202, %p203
      %p206 = scmp.ne.s32.totalorder %s189, %s205
      %p207 = scmp.eq.s32.totalorder %s27, 0
      %p208 = por %p206, %p207
      %p209 = scmp.le.s32.totalorder 1, %s21
      %p210 = scmp.lt.s32.totalorder %s21, 5
      %p211 = pnand %p209, %p210
      %p212 = pneg %p211
      // Predicated region
      $region9: #{tpu_custom_call.1} parent=5 // pred_check
        _
      $region10: #{tpu_custom_call.1} parent=5 // pred_check_branch
        %214 = sbr.rel (%p211) target = $region12
      $region11: #{tpu_custom_call.1} parent=5 // pred_region
        %s215 = ssub.s32 %s21, 1
        // Predicated region
        $region13: #{tpu_custom_call.1} parent=11 // pred_check
          %p216 = pneg %p110
        $region14: #{tpu_custom_call.1} parent=11 // pred_check_branch
          %218 = sbr.rel (%p216) target = $region16
        $region15: #{tpu_custom_call.1} parent=11 // pred_region
          _
        $region16: #{tpu_custom_call.1} parent=11 // pred_fallthru
          _
        // Predicated region
        $region17: #{tpu_custom_call.1} parent=11 // pred_check
          %p219 = pneg %p131
        $region18: #{tpu_custom_call.1} parent=11 // pred_check_branch
          %221 = sbr.rel (%p219) target = $region20
        $region19: #{tpu_custom_call.1} parent=11 // pred_region
          _
        $region20: #{tpu_custom_call.1} parent=11 // pred_fallthru
          _
        // Predicated region
        $region21: #{tpu_custom_call.1} parent=11 // pred_check
          %p222 = pneg %p152
        $region22: #{tpu_custom_call.1} parent=11 // pred_check_branch
          %224 = sbr.rel (%p222) target = $region24
        $region23: #{tpu_custom_call.1} parent=11 // pred_region
          _
        $region24: #{tpu_custom_call.1} parent=11 // pred_fallthru
          _
        // Predicated region
        $region25: #{tpu_custom_call.1} parent=11 // pred_check
          %p225 = pneg %p173
        $region26: #{tpu_custom_call.1} parent=11 // pred_check_branch
          %227 = sbr.rel (%p225) target = $region28
        $region27: #{tpu_custom_call.1} parent=11 // pred_region
          _
        $region28: #{tpu_custom_call.1} parent=11 // pred_fallthru
          _
      $region12: #{tpu_custom_call.1} parent=5 // pred_fallthru
        _
      %p228 = scmp.lt.s32.totalorder %s21, 4
      // Predicated region
      $region29: #{tpu_custom_call.1} parent=5 // pred_check
        %p229 = pneg %p228
      $region30: #{tpu_custom_call.1} parent=5 // pred_check_branch
        %231 = sbr.rel (%p229) target = $region32
      $region31: #{tpu_custom_call.1} parent=5 // pred_region
        // Predicated region
        $region33: #{tpu_custom_call.1} parent=31 // pred_check
          %p232 = pneg %p55
        $region34: #{tpu_custom_call.1} parent=31 // pred_check_branch
          %234 = sbr.rel (%p232) target = $region36
        $region35: #{tpu_custom_call.1} parent=31 // pred_region
          %s235 = sand.u32 %s45, 1
          %s236 = scalar_lea.sflag [#allocation3], %s235
          %s237 = sand.u32 %s45, 1
          %s238 = smul.addr %s237, 4
          %s239 = scalar_lea.vmem [#allocation2], %s238
          %241 = vsyncadd %s236, 0
          %s242 = smul.addr %s28, 2
          %s243 = sadd.s32 %s29, %s242
          %s244 = smul.addr %s243, 4
          %s245 = scalar_lea.hbm %s0, %s244
          %s247 = sshll.u32 %s245, 4
          %s248 = int_to_ptr.hbm [resolvable:$true] %s247
          %s249 = sshll.u32 %s239, 4
          %s250 = int_to_ptr.vmem [resolvable:$true] %s249
          %252 = dma.hbm_to_vmem [thread:$0]  %s248, 64, %s250, %s236
        $region36: #{tpu_custom_call.1} parent=31 // pred_fallthru
          _
        // Predicated region
        $region37: #{tpu_custom_call.1} parent=31 // pred_check
          %p253 = pneg %p83
        $region38: #{tpu_custom_call.1} parent=31 // pred_check_branch
          %255 = sbr.rel (%p253) target = $region40
        $region39: #{tpu_custom_call.1} parent=31 // pred_region
          %s256 = sand.u32 %s73, 1
          %s257 = scalar_lea.sflag [#allocation6], %s256
          %s258 = sand.u32 %s73, 1
          %s259 = smul.addr %s258, 4
          %s260 = scalar_lea.vmem [#allocation5], %s259
          %262 = vsyncadd %s257, 0
          %s263 = smul.addr %s28, 2
          %s264 = sadd.s32 %s29, %s263
          %s265 = smul.addr %s264, 4
          %s266 = scalar_lea.hbm %s1, %s265
          %s268 = sshll.u32 %s266, 4
          %s269 = int_to_ptr.hbm [resolvable:$true] %s268
          %s270 = sshll.u32 %s260, 4
          %s271 = int_to_ptr.vmem [resolvable:$true] %s270
          %273 = dma.hbm_to_vmem [thread:$0]  %s269, 64, %s271, %s257
        $region40: #{tpu_custom_call.1} parent=31 // pred_fallthru
          _
      $region32: #{tpu_custom_call.1} parent=5 // pred_fallthru
        _
      %p274 = scmp.le.s32.totalorder 1, %s21
      %p275 = scmp.lt.s32.totalorder %s21, 5
      %p276 = pnand %p274, %p275
      %p277 = pneg %p276
      // Predicated region
      $region41: #{tpu_custom_call.1} parent=5 // pred_check
        _
      $region42: #{tpu_custom_call.1} parent=5 // pred_check_branch
        %279 = sbr.rel (%p276) target = $region44
      $region43: #{tpu_custom_call.1} parent=5 // pred_region
        %s280 = ssub.s32 %s21, 1
        %s281 = sand.u32 %s48, 1
        %s282 = scalar_lea.sflag [#allocation3], %s281
        %s283 = sand.u32 %s48, 1
        %s284 = smul.addr %s283, 4
        %s285 = scalar_lea.vmem [#allocation2], %s284
        // Predicated region
        $region45: #{tpu_custom_call.1} parent=43 // pred_check
          %p286 = pneg %p61
        $region46: #{tpu_custom_call.1} parent=43 // pred_check_branch
          %288 = sbr.rel (%p286) target = $region48
        $region47: #{tpu_custom_call.1} parent=43 // pred_region
          %290 = dma.done %s282, 64
        $region48: #{tpu_custom_call.1} parent=43 // pred_fallthru
          _
        %s291 = sand.u32 %s76, 1
        %s292 = scalar_lea.sflag [#allocation6], %s291
        %s293 = sand.u32 %s76, 1
        %s294 = smul.addr %s293, 4
        %s295 = scalar_lea.vmem [#allocation5], %s294
        // Predicated region
        $region49: #{tpu_custom_call.1} parent=43 // pred_check
          %p296 = pneg %p89
        $region50: #{tpu_custom_call.1} parent=43 // pred_check_branch
          %298 = sbr.rel (%p296) target = $region52
        $region51: #{tpu_custom_call.1} parent=43 // pred_region
          %300 = dma.done %s292, 64
        $region52: #{tpu_custom_call.1} parent=43 // pred_fallthru
          _
        %s301 = sand.u32 %s48, 1
        %s302 = scalar_lea.sflag [#allocation3], %s301
        %s303 = sand.u32 %s48, 1
        %s304 = smul.addr %s303, 4
        %s305 = scalar_lea.vmem [#allocation2], %s304
        %p306 = pneg %p61
        %p307 = pneg %p58
        %s308 = sand.u32 %s76, 1
        %s309 = scalar_lea.sflag [#allocation6], %s308
        %s310 = sand.u32 %s76, 1
        %s311 = smul.addr %s310, 4
        %s312 = scalar_lea.vmem [#allocation5], %s311
        %p313 = pneg %p89
        %p314 = pneg %p86
        %p315 = pneg %p110
        %p316 = pneg %p107
        %p317 = pneg %p131
        %p318 = pneg %p128
        %p319 = pneg %p152
        %p320 = pneg %p149
        %p321 = pneg %p173
        %p322 = pneg %p170
        %p323 = pneg %p201
        %p324 = pneg %p198
        %s325 = sand.u32 %s188, 1
        %s326 = scalar_lea.sflag [#allocation4], %s325
        %s327 = sand.u32 %s188, 1
        %s328 = smul.addr %s327, 4
        %s329 = scalar_lea.vmem [#allocation7], %s328
        %v330 = vld [vmem:[%s285] sm:$0xf]
        %v331 = vld [vmem:[%s295] sm:$0xf]
        %v333 = vrot.slane %v331, 4
        %vm335 = vcmask 1043456
        %v336 = vsel %vm335, %v330, %v333
        %v337 = vld [vmem:[%s2] sm:$0xf]
        %v338 = vld [vmem:[%s3] sm:$0xf]
        %340 = vset.pattern.permute.xlu0 0
        %341 = vperm.xlu0 %340, %v338
        %v342 = vpop.permute.xlu0 %341
        %vm344 = vcmask 64512
        %v346 = vsel %vm344, %v337, 0
        %348 = vmatpush.msra.mxu0 0.0
        %349 = vmatpush.msra.mxu0 0.0
        %350 = vmatpush.msra.mxu0 0.0
        %351 = vmatpush.msra.mxu0 0.0
        %352 = vmatpush.msra.mxu0 0.0
        %353 = vmatpush.msra.mxu0 0.0
        %354 = vmatpush.msra.mxu0 0.0
        %355 = vmatpush.msra.mxu0 0.0
        %356 = vmatpush.msra.mxu0 0.0
        %357 = vmatpush.msra.mxu0 0.0
        %358 = vmatpush.msra.mxu0 0.0
        %359 = vmatpush.msra.mxu0 0.0
        %360 = vmatpush.msra.mxu0 0.0
        %361 = vmatpush.msra.mxu0 0.0
        %362 = vmatpush.msra.mxu0 0.0
        %363 = vmatpush.msra.mxu0 %v336
        %364 = vmatmul.f32.gmra.mxu0 %v346
        %v365 = vpop.f32.mrf.mxu0
        %v366 = vadd.f32 %v342, %v365
        %367 = vdwg.mxu0
        %v368 = vmax.f32 %v366, 0.0
        %v369 = vld [vmem:[%s4] sm:$0xf]
        %v370 = vld [vmem:[%s5] sm:$0xf]
        %372 = vset.pattern.permute.xlu0 0
        %373 = vperm.xlu0 %372, %v370
        %v374 = vpop.permute.xlu0 %373
        %vm376 = vcmask 31744
        %v378 = vsel %vm376, %v369, 0
        %v381 = vsel %vm335, %v368, 0
        %383 = vmatpush.msra.mxu0 0.0
        %384 = vmatpush.msra.mxu0 0.0
        %385 = vmatpush.msra.mxu0 0.0
        %386 = vmatpush.msra.mxu0 0.0
        %387 = vmatpush.msra.mxu0 0.0
        %388 = vmatpush.msra.mxu0 0.0
        %389 = vmatpush.msra.mxu0 0.0
        %390 = vmatpush.msra.mxu0 0.0
        %391 = vmatpush.msra.mxu0 0.0
        %392 = vmatpush.msra.mxu0 0.0
        %393 = vmatpush.msra.mxu0 0.0
        %394 = vmatpush.msra.mxu0 0.0
        %395 = vmatpush.msra.mxu0 0.0
        %396 = vmatpush.msra.mxu0 0.0
        %397 = vmatpush.msra.mxu0 0.0
        %398 = vmatpush.msra.mxu0 %v381
        %399 = vmatmul.f32.gmra.mxu0 %v378
        %v400 = vpop.f32.mrf.mxu0
        %v401 = vadd.f32 %v374, %v400
        %402 = vdwg.mxu0
        %v403 = vxor.u32 %v401, 2147483648
        %v404 = vmul.f32 %v403, 1.442695
        %v405 = vpow.pop %v404
        %v406 = vadd.f32 %v405, 1.0
        %v407 = vrcp.pop %v406
        %v408 = vmul.f32 %v406, %v407
        %v409 = vsub.f32 1.0, %v408
        %v410 = vmul.f32 %v407, %v409
        %v411 = vadd.f32 %v407, %v410
        %vm412 = vweird.f32 %v406
        %vm413 = vweird.f32 %v407
        %vm414 = vmor %vm412, %vm413
        %v415 = vsel %vm414, %v407, %v411
        %v416 = vand.u32 2147483647, %v406
        %vm417 = vcmp.eq.f32.partialorder %v416, 8.507059e+37
        %v418 = vand.u32 %v406, 2147483648
        %v419 = vor.u32 1.1754944e-38, %v418
        %v420 = vsel %vm417, %v419, %v415
        %v421 = vmul.f32 1.0, %v420
        %v422 = vsub.f32 %v330, %v331
        %v423 = vmul.f32 %v421, %v422
        %v424 = vadd.f32 %v331, %v423
        %425 = vst [vmem:[%s329] sm:$0xf] %v424
        %s426 = sand.u32 %s188, 1
        %s427 = scalar_lea.sflag [#allocation4], %s426
        %s428 = sand.u32 %s188, 1
        %s429 = smul.addr %s428, 4
        %s430 = scalar_lea.vmem [#allocation7], %s429
        // Predicated region
        $region53: #{tpu_custom_call.1} parent=43 // pred_check
          %p431 = pneg %p198
        $region54: #{tpu_custom_call.1} parent=43 // pred_check_branch
          %433 = sbr.rel (%p431) target = $region56
        $region55: #{tpu_custom_call.1} parent=43 // pred_region
          %435 = vsyncadd %s427, 0
          %s436 = smul.addr %s30, 2
          %s437 = sadd.s32 %s31, %s436
          %s438 = smul.addr %s437, 4
          %s439 = scalar_lea.hbm %s6, %s438
          %s441 = sshll.u32 %s430, 4
          %s442 = int_to_ptr.vmem [resolvable:$true] %s441
          %s443 = sshll.u32 %s439, 4
          %s444 = int_to_ptr.hbm [resolvable:$true] %s443
          %446 = dma.vmem_to_hbm [thread:$0]  %s442, 64, %s444, %s427
        $region56: #{tpu_custom_call.1} parent=43 // pred_fallthru
          _
      $region44: #{tpu_custom_call.1} parent=5 // pred_fallthru
        _
      %p447 = scmp.le.s32.totalorder 2, %s21
      // Predicated region
      $region57: #{tpu_custom_call.1} parent=5 // pred_check
        %p448 = pneg %p447
      $region58: #{tpu_custom_call.1} parent=5 // pred_check_branch
        %450 = sbr.rel (%p448) target = $region60
      $region59: #{tpu_custom_call.1} parent=5 // pred_region
        %s451 = ssub.s32 %s21, 2
        // Predicated region
        $region61: #{tpu_custom_call.1} parent=59 // pred_check
          %p452 = pneg %p204
        $region62: #{tpu_custom_call.1} parent=59 // pred_check_branch
          %454 = sbr.rel (%p452) target = $region64
        $region63: #{tpu_custom_call.1} parent=59 // pred_region
          %s455 = sand.u32 %s189, 1
          %s456 = scalar_lea.sflag [#allocation4], %s455
          %s457 = sand.u32 %s189, 1
          %s458 = smul.addr %s457, 4
          %s459 = scalar_lea.vmem [#allocation7], %s458
          %461 = dma.done %s456, 64
        $region64: #{tpu_custom_call.1} parent=59 // pred_fallthru
          _
      $region60: #{tpu_custom_call.1} parent=5 // pred_fallthru
        _
    $region6: #{tpu_custom_call.1} parent=1 // loop_footer
      %s25 = sadd.s32 1, %s21
    $region7: #{tpu_custom_call.1} parent=1 // loop_footer_branch
      %20 = sbr.rel target = $region3
    $region8: #{tpu_custom_call.1} parent=1 // loop_exit
      _
    %462 = vsyncpa [#allocation3], 1
    %s463 = scalar_lea.sflag [#allocation3], 1
    %464 = vsyncpa %s463, 1
    %465 = vsyncpa [#allocation6], 1
    %s466 = scalar_lea.sflag [#allocation6], 1
    %467 = vsyncpa %s466, 1
    %468 = vsyncpa [#allocation4], 1
    %s469 = scalar_lea.sflag [#allocation4], 1
    %470 = vsyncpa %s469, 1

</llo_original>
